<compile_context>
chip_gen: v5e
topology: v5e:2x2
jax: 0.10.0
libtpu: 0.0.40
codegen_flags: <defaults>
</compile_context>

<pallas_src>
import jax
import jax.numpy as jnp
from jax.experimental import pallas as pl
from jax.experimental.pallas import tpu as pltpu

ARGUMENT_SIZE = 8                       # stands in for config.ARGUMENT_SIZE
INPUT_SIZE = ARGUMENT_SIZE * 2 + 1      # 17
LAYERS_SIZE = 300
NUM_LAYERS = 3
OUTPUT_SIZE = 2                         # -> final Linear(300, 1) + sigmoid branch

HIDDEN_PAD = 384                        # 300 zero-padded to 3*128 lanes
MAX_TILE_B = 1024                       # batch rows per grid step (fits all VMEM budgets)


def _round_up(x, m):
    return (x + m - 1) // m * m


def mlp_kernel(x_ref, w1_ref, b1_ref, wc_ref, bc_ref, o_ref):
    # fc1 on the MXU (bf16 inputs, f32 accumulation) + bias + ReLU (f32 epilogue)
    x = x_ref[...].astype(jnp.bfloat16)
    h = jnp.dot(x, w1_ref[...], preferred_element_type=jnp.float32) + b1_ref[...]
    h = jnp.maximum(h, 0.0)

    # fused affine tail: L1 -> L2 -> L3 -> output collapsed into one (H, 1) GEMV
    z = jnp.dot(h.astype(jnp.bfloat16), wc_ref[...],
                preferred_element_type=jnp.float32) + bc_ref[...]

    # sigmoid: exp and approximate reciprocal both run on the EUP slot
    o_ref[...] = pl.reciprocal(1.0 + jnp.exp(-z), approx=True)


def prepare_params(params):
    """Fold the activation-free layers into one affine map and pad the hidden
    width to a lane-aligned 384.  Run ONCE per weight set (amortized)."""
    (w1, b1, wl1, bl1, wl2, bl2, wl3, bl3, wo, bo) = params
    # collapse L1 -> L2 -> L3 -> output (no nonlinearity between them)
    wc = wl1 @ wl2 @ wl3 @ wo                               # (300, 1)
    bc = ((bl1 @ wl2 + bl2) @ wl3 + bl3) @ wo + bo          # (1, 1)
    # zero-pad hidden width 300 -> 384; exact since padded activations are relu(0+0)=0
    pad_h = HIDDEN_PAD - LAYERS_SIZE
    w1p = jnp.pad(w1, ((0, 0), (0, pad_h)))
    b1p = jnp.pad(b1, ((0, 0), (0, pad_h)))
    wcp = jnp.pad(wc, ((0, pad_h), (0, 0)))
    return (w1p.astype(jnp.bfloat16),        # (17, 384)  bf16
            b1p.astype(jnp.float32),         # (1, 384)   f32
            wcp.astype(jnp.bfloat16),        # (384, 1)   bf16
            bc.astype(jnp.float32))          # (1, 1)     f32


@jax.jit
def net_forward(x, fused_params):
    """x: [B, INPUT_SIZE] f32.  fused_params: output of prepare_params."""
    w1, b1, wc, bc = fused_params
    B = x.shape[0]
    tile_b = min(MAX_TILE_B, _round_up(B, 8))
    b_pad = _round_up(B, tile_b)
    if b_pad != B:
        x = jnp.pad(x, ((0, b_pad - B), (0, 0)))

    out = pl.pallas_call(
        mlp_kernel,
        out_shape=jax.ShapeDtypeStruct((b_pad, 1), jnp.float32),
        grid_spec=pltpu.PrefetchScalarGridSpec(
            num_scalar_prefetch=0,
            grid=(b_pad // tile_b,),
            in_specs=[
                # x tiles stream (double-buffered) over the batch grid
                pl.BlockSpec((tile_b, INPUT_SIZE), lambda i: (i, 0)),
                # weights/biases stay resident (same block index every step)
                pl.BlockSpec((INPUT_SIZE, HIDDEN_PAD), lambda i: (0, 0)),
                pl.BlockSpec((1, HIDDEN_PAD), lambda i: (0, 0)),
                pl.BlockSpec((HIDDEN_PAD, 1), lambda i: (0, 0)),
                pl.BlockSpec((1, 1), lambda i: (0, 0)),
            ],
            out_specs=pl.BlockSpec((tile_b, 1), lambda i: (i, 0)),
        ),
        compiler_params=pltpu.CompilerParams(
            dimension_semantics=("parallel",)),   # shards batch tiles across v7x's 2 TCs
    )(x, w1, b1, wc, bc)
    return out[:B]


def init_params(key):
    """Deterministic synthetic init (PyTorch-Linear-like uniform fan-in scaling)."""
    def linear(key, fan_in, fan_out):
        kw, kb = jax.random.split(key)
        bound = 1.0 / jnp.sqrt(fan_in)
        # stored as (in, out) so forward is x @ W
        w = jax.random.uniform(kw, (fan_in, fan_out), jnp.float32, -bound, bound)
        b = jax.random.uniform(kb, (1, fan_out), jnp.float32, -bound, bound)
        return w, b

    keys = jax.random.split(key, 2 + NUM_LAYERS)
    params = []
    params += list(linear(keys[0], INPUT_SIZE, LAYERS_SIZE))          # fc1
    for i in range(NUM_LAYERS):                                       # hidden layers
        params += list(linear(keys[1 + i], LAYERS_SIZE, LAYERS_SIZE))
    params += list(linear(keys[-1], LAYERS_SIZE, 1))                  # output layer
    return tuple(params)


def net_reference(x, params):
    """Pure-JAX full-f32 reference (exact PyTorch forward semantics)."""
    (w1, b1, wl1, bl1, wl2, bl2, wl3, bl3, wo, bo) = params
    h = jnp.maximum(x @ w1 + b1, 0.0)
    h = h @ wl1 + bl1
    h = h @ wl2 + bl2
    h = h @ wl3 + bl3
    return jax.nn.sigmoid(h @ wo + bo)


def net_reference_quantized(x, fused_params):
    """Pure-JAX reference mirroring the kernel's bf16-weight / f32-accumulate math."""
    w1, b1, wc, bc = fused_params
    h = jnp.dot(x.astype(jnp.bfloat16), w1, preferred_element_type=jnp.float32) + b1
    h = jnp.maximum(h, 0.0)
    z = jnp.dot(h.astype(jnp.bfloat16), wc, preferred_element_type=jnp.float32) + bc
    return jax.nn.sigmoid(z)


if __name__ == "__main__":
    key = jax.random.PRNGKey(0)
    kx, kp = jax.random.split(key)

    B = 8
    x = jax.random.normal(kx, (B, INPUT_SIZE), dtype=jnp.float32)
    params = init_params(kp)
    fused = prepare_params(params)          # once per weight set (amortized)

    out = jax.block_until_ready(net_forward(x, fused))
    assert out.shape == (B, 1)

    # tight check vs. a reference with identical quantization
    ref_q = net_reference_quantized(x, fused)
    assert jnp.allclose(out, ref_q, atol=2e-3, rtol=0.0)

    # loose check vs. the full-precision layer-by-layer (PyTorch-semantics) reference
    ref_f32 = net_reference(x, params)
    assert jnp.allclose(out, ref_f32, atol=3e-2, rtol=0.0)

    print("KERNEL_OK")
</pallas_src>

<mosaic_0001>
module attributes {stable_mosaic.version = 11 : i64} {
  func.func @mlp_kernel(%arg0: i32, %arg1: memref<8x17xf32, #tpu.memory_space<vmem>>, %arg2: memref<17x384xbf16, #tpu.memory_space<vmem>>, %arg3: memref<1x384xf32, #tpu.memory_space<vmem>>, %arg4: memref<384x1xbf16, #tpu.memory_space<vmem>>, %arg5: memref<1x1xf32, #tpu.memory_space<vmem>>, %arg6: memref<8x1xf32, #tpu.memory_space<vmem>>) attributes {dimension_semantics = [#tpu.dimension_semantics<parallel>], iteration_bounds = array<i64: 1>, scalar_prefetch = 0 : i64, scratch_operands = 0 : i64, tpu.core_type = #tpu.core_type<tc>, window_params = [{transform_indices = @transform_0, window_bounds = array<i64: 8, 17>}, {pipeline_mode = #tpu.pipeline_mode<synchronous>, transform_indices = @transform_1, window_bounds = array<i64: 17, 384>}, {pipeline_mode = #tpu.pipeline_mode<synchronous>, transform_indices = @transform_2, window_bounds = array<i64: 1, 384>}, {pipeline_mode = #tpu.pipeline_mode<synchronous>, transform_indices = @transform_3, window_bounds = array<i64: 384, 1>}, {pipeline_mode = #tpu.pipeline_mode<synchronous>, transform_indices = @transform_4, window_bounds = array<i64: 1, 1>}, {transform_indices = @transform_5, window_bounds = array<i64: 8, 1>}]} {
    %c0 = arith.constant 0 : index
    %c0_0 = arith.constant 0 : index
    %0 = vector.load %arg1[%c0, %c0_0] : memref<8x17xf32, #tpu.memory_space<vmem>>, vector<8x17xf32>
    %1 = arith.truncf %0 : vector<8x17xf32> to vector<8x17xbf16>
    %c0_1 = arith.constant 0 : index
    %c0_2 = arith.constant 0 : index
    %2 = vector.load %arg2[%c0_1, %c0_2] : memref<17x384xbf16, #tpu.memory_space<vmem>>, vector<17x384xbf16>
    %cst = arith.constant dense<0.000000e+00> : vector<8x384xf32>
    %3 = tpu.matmul %1, %2, %cst {dimension_numbers = #tpu.dot_dimension_numbers<[1], [0], [0], [1], [0, 0, 1, 1], [], []>} : vector<8x17xbf16>, vector<17x384xbf16>, vector<8x384xf32> -> vector<8x384xf32>
    %c0_3 = arith.constant 0 : index
    %c0_4 = arith.constant 0 : index
    %4 = vector.load %arg3[%c0_3, %c0_4] : memref<1x384xf32, #tpu.memory_space<vmem>>, vector<1x384xf32>
    %5 = vector.broadcast %4 : vector<1x384xf32> to vector<8x384xf32>
    %6 = arith.addf %3, %5 : vector<8x384xf32>
    %cst_5 = arith.constant 0.000000e+00 : f32
    %7 = vector.broadcast %cst_5 : f32 to vector<8x384xf32>
    %8 = arith.maximumf %6, %7 : vector<8x384xf32>
    %9 = arith.truncf %8 : vector<8x384xf32> to vector<8x384xbf16>
    %c0_6 = arith.constant 0 : index
    %c0_7 = arith.constant 0 : index
    %10 = vector.load %arg4[%c0_6, %c0_7] : memref<384x1xbf16, #tpu.memory_space<vmem>>, vector<384x1xbf16>
    %cst_8 = arith.constant dense<0.000000e+00> : vector<8x1xf32>
    %11 = tpu.matmul %9, %10, %cst_8 {dimension_numbers = #tpu.dot_dimension_numbers<[1], [0], [0], [1], [0, 0, 1, 1], [], []>} : vector<8x384xbf16>, vector<384x1xbf16>, vector<8x1xf32> -> vector<8x1xf32>
    %c0_9 = arith.constant 0 : index
    %c0_10 = arith.constant 0 : index
    %12 = vector.load %arg5[%c0_9, %c0_10] : memref<1x1xf32, #tpu.memory_space<vmem>>, vector<1x1xf32>
    %13 = vector.broadcast %12 : vector<1x1xf32> to vector<8x1xf32>
    %14 = arith.addf %11, %13 : vector<8x1xf32>
    %cst_11 = arith.constant 0.000000e+00 : f32
    %15 = vector.broadcast %cst_11 : f32 to vector<8x1xf32>
    %16 = arith.subf %15, %14 : vector<8x1xf32>
    %17 = math.exp %16 : vector<8x1xf32>
    %cst_12 = arith.constant 1.000000e+00 : f32
    %18 = vector.broadcast %cst_12 : f32 to vector<8x1xf32>
    %19 = arith.addf %18, %17 : vector<8x1xf32>
    %20 = tpu.reciprocal %19 {approx = true} : vector<8x1xf32> -> vector<8x1xf32>
    %c0_13 = arith.constant 0 : index
    %c0_14 = arith.constant 0 : index
    %21 = vector.load %arg6[%c0_13, %c0_14] : memref<8x1xf32, #tpu.memory_space<vmem>>, vector<8x1xf32>
    tpu.vector_store %arg6[%c0_13, %c0_14], %20 {strides = array<i32>} : memref<8x1xf32, #tpu.memory_space<vmem>>, vector<8x1xf32>,
    return
  }
  func.func @transform_0(%arg0: i32) -> (i32, i32) {
    %c0_i32 = arith.constant 0 : i32
    %c0_i32_0 = arith.constant 0 : i32
    return %arg0, %c0_i32 : i32, i32
  }
  func.func @transform_1(%arg0: i32) -> (i32, i32) {
    %c0_i32 = arith.constant 0 : i32
    %c0_i32_0 = arith.constant 0 : i32
    %c0_i32_1 = arith.constant 0 : i32
    return %c0_i32, %c0_i32_0 : i32, i32
  }
  func.func @transform_2(%arg0: i32) -> (i32, i32) {
    %c0_i32 = arith.constant 0 : i32
    %c0_i32_0 = arith.constant 0 : i32
    %c0_i32_1 = arith.constant 0 : i32
    return %c0_i32, %c0_i32_0 : i32, i32
  }
  func.func @transform_3(%arg0: i32) -> (i32, i32) {
    %c0_i32 = arith.constant 0 : i32
    %c0_i32_0 = arith.constant 0 : i32
    %c0_i32_1 = arith.constant 0 : i32
    return %c0_i32, %c0_i32_0 : i32, i32
  }
  func.func @transform_4(%arg0: i32) -> (i32, i32) {
    %c0_i32 = arith.constant 0 : i32
    %c0_i32_0 = arith.constant 0 : i32
    %c0_i32_1 = arith.constant 0 : i32
    return %c0_i32, %c0_i32_0 : i32, i32
  }
  func.func @transform_5(%arg0: i32) -> (i32, i32) {
    %c0_i32 = arith.constant 0 : i32
    %c0_i32_0 = arith.constant 0 : i32
    return %arg0, %c0_i32 : i32, i32
  }
}

</mosaic_0001>

<llo_original>
// kernel: net_forward.1
$region0: #{net_forward.1}
  #allocation0 [shape = 'u32[]', space=smem, size = 0x4, offset = 0x4, fixed_abs, tag = 'smem constant byte address 0x4 - core index']
  #allocation1 [shape = 'u32[72,128]{1,0:T(1,128)}', space=vmem, size = 0x9000, scoped, tag = 'internal scratch']
  #allocation2 [shape = 'f32[1,1]{1,0:T(1,128)S(1)}', space=vmem, size = 0x200, scoped, tag = 'scoped memory for net_forward.1']
  %s0 = inlined_call_operand.vmem [shape: f32[8,17], index: 0, kind: input, shape index: {}]
  %s1 = inlined_call_operand.vmem [shape: bf16[17,384], index: 1, kind: input, shape index: {}]
  %s2 = inlined_call_operand.vmem [shape: f32[1,384], index: 2, kind: input, shape index: {}]
  %s3 = inlined_call_operand.vmem [shape: bf16[384,1], index: 3, kind: input, shape index: {}]
  %s4 = inlined_call_operand.<no memory space> [shape: f32[1,1], index: 4, kind: input, shape index: {}]
  %s5 = inlined_call_operand.vmem [shape: f32[8,1], index: 5, kind: output, shape index: {}]
  %s6 = sld [smem:[#allocation0]]
  $region30: #{net_forward.1} parent=0
    _
  %s8 = ssub.s32 1, %s6
  %s9 = scalar_select 0, %s8, %s6
  %v10 = vstv %s4
  %11 = vst [vmem:[#allocation2] sm:$0x1] %v10
  // Predicated region
  $region2: #{net_forward.1} parent=0 // pred_check
    _
  $region3: #{net_forward.1} parent=0 // pred_check_branch
    %13 = sbr.rel (0) target = $region5
  $region4: #{net_forward.1} parent=0 // pred_region
    _
  $region5: #{net_forward.1} parent=0 // pred_fallthru
    _
  // Predicated region
  $region6: #{net_forward.1} parent=0 // pred_check
    _
  $region7: #{net_forward.1} parent=0 // pred_check_branch
    %15 = sbr.rel (0) target = $region9
  $region8: #{net_forward.1} parent=0 // pred_region
    _
  $region9: #{net_forward.1} parent=0 // pred_fallthru
    _
  // Predicated region
  $region10: #{net_forward.1} parent=0 // pred_check
    _
  $region11: #{net_forward.1} parent=0 // pred_check_branch
    %17 = sbr.rel (0) target = $region13
  $region12: #{net_forward.1} parent=0 // pred_region
    _
  $region13: #{net_forward.1} parent=0 // pred_fallthru
    _
  // Predicated region
  $region14: #{net_forward.1} parent=0 // pred_check
    _
  $region15: #{net_forward.1} parent=0 // pred_check_branch
    %19 = sbr.rel (0) target = $region17
  $region16: #{net_forward.1} parent=0 // pred_region
    _
  $region17: #{net_forward.1} parent=0 // pred_fallthru
    _
  // Predicated region
  $region18: #{net_forward.1} parent=0 // pred_check
    _
  $region19: #{net_forward.1} parent=0 // pred_check_branch
    %21 = sbr.rel (0) target = $region21
  $region20: #{net_forward.1} parent=0 // pred_region
    _
  $region21: #{net_forward.1} parent=0 // pred_fallthru
    _
  %v23 = vld [vmem:[%s0] sm:$0xff]
  %v24 = vpack.c.bf16 %v23, %v23
  %v25 = vld [vmem:[%s1] sm:$0xff]
  %v26 = vld [vmem:[%s1 + $0x8] sm:$0xf]
  %v27 = vld [vmem:[%s1 + $0xc] sm:$0xff]
  %v28 = vld [vmem:[%s1 + $0x14] sm:$0xf]
  %v29 = vld [vmem:[%s1 + $0x18] sm:$0x11]
  %v30 = vld [vmem:[%s1 + $0x20] sm:$0x1]
  %v31 = vld [vmem:[%s2] sm:$0x7]
  %v33 = vperm.slane %v31, 0
  %v34 = vperm.slane %v31, 1
  %v35 = vperm.slane %v31, 2
  %v45 = vunpack.c.l.b16 %v25
  %v46 = vunpack.c.h.b16 %v25
  %v47 = vunpack.c.l.b16 %v26
  %v48 = vunpack.c.l.b16 %v27
  %v49 = vunpack.c.h.b16 %v27
  %v50 = vunpack.c.l.b16 %v28
  %v51 = vunpack.c.l.b16 %v29
  %v52 = vunpack.c.h.b16 %v29
  %v53 = vunpack.c.l.b16 %v30
  %v54 = vpack.c.b16 %v48, %v45
  %v55 = vpack.c.b16 %v49, %v46
  %v56 = vpack.c.b16 %v50, %v47
  %v57 = vpack.c.b16 %v51, %v51
  %v58 = vpack.c.b16 %v52, %v52
  %v59 = vpack.c.b16 %v53, %v53
  %vm63 = vcmask 138240
  %v65 = vsel %vm63, %v24, 0
  %vm67 = vcmask 1040384
  %v68 = vsel 0, 4294967295, 65535
  %v69 = vsel %vm67, %v68, 0
  %v71 = vand.u32 %v57, %v69
  %v74 = vand.u32 %v58, %v69
  %v77 = vand.u32 %v59, %v69
  %79 = vmatpush.bf16.msra.mxu0 0
  %80 = vmatpush.bf16.msra.mxu0 0
  %81 = vmatpush.bf16.msra.mxu0 0
  %82 = vmatpush.bf16.msra.mxu0 0
  %83 = vmatpush.bf16.msra.mxu0 0
  %84 = vmatpush.bf16.msra.mxu0 0
  %85 = vmatpush.bf16.msra.mxu0 %v71
  %86 = vmatpush.bf16.msra.mxu0 %v54
  %87 = vmatmul.bf16.gmra.mxu0 %v65
  %v88 = vpop.f32.mrf.mxu0
  %v89 = vadd.f32 %v33, %v88
  %v90 = vpop.f32.mrf.mxu0
  %91 = vdwg.mxu0
  %92 = vmatpush.bf16.msra.mxu0 0
  %93 = vmatpush.bf16.msra.mxu0 0
  %94 = vmatpush.bf16.msra.mxu0 0
  %95 = vmatpush.bf16.msra.mxu0 0
  %96 = vmatpush.bf16.msra.mxu0 0
  %97 = vmatpush.bf16.msra.mxu0 0
  %98 = vmatpush.bf16.msra.mxu0 %v74
  %99 = vmatpush.bf16.msra.mxu0 %v55
  %100 = vmatmul.bf16.gmra.mxu0 %v65
  %v101 = vpop.f32.mrf.mxu0
  %v102 = vadd.f32 %v34, %v101
  %v103 = vpop.f32.mrf.mxu0
  %104 = vdwg.mxu0
  %105 = vmatpush.bf16.msra.mxu0 0
  %106 = vmatpush.bf16.msra.mxu0 0
  %107 = vmatpush.bf16.msra.mxu0 0
  %108 = vmatpush.bf16.msra.mxu0 0
  %109 = vmatpush.bf16.msra.mxu0 0
  %110 = vmatpush.bf16.msra.mxu0 0
  %111 = vmatpush.bf16.msra.mxu0 %v77
  %112 = vmatpush.bf16.msra.mxu0 %v56
  %113 = vmatmul.bf16.gmra.mxu0 %v65
  %v114 = vpop.f32.mrf.mxu0
  %v115 = vadd.f32 %v35, %v114
  %v116 = vpop.f32.mrf.mxu0
  %117 = vdwg.mxu0
  %v118 = vmax.f32 %v89, 0.0
  %v119 = vmax.f32 %v102, 0.0
  %v120 = vmax.f32 %v115, 0.0
  %v121 = vpack.c.bf16 %v118, %v118
  %v122 = vpack.c.bf16 %v119, %v119
  %v123 = vpack.c.bf16 %v120, %v120
  %v124 = vld [vmem:[%s3] sm:$0xf]
  %v125 = vld [vmem:[%s3 + $0x4] sm:$0xf]
  %v126 = vld [vmem:[%s3 + $0x8] sm:$0xf]
  %v127 = vld [vmem:[%s3 + $0xc] sm:$0xf]
  %v128 = vld [vmem:[%s3 + $0x10] sm:$0xf]
  %v129 = vld [vmem:[%s3 + $0x14] sm:$0xf]
  %v130 = vld [vmem:[%s3 + $0x18] sm:$0xf]
  %v131 = vld [vmem:[%s3 + $0x1c] sm:$0xf]
  %v132 = vld [vmem:[%s3 + $0x20] sm:$0xf]
  %v133 = vld [vmem:[%s3 + $0x24] sm:$0xf]
  %v134 = vld [vmem:[%s3 + $0x28] sm:$0xf]
  %v135 = vld [vmem:[%s3 + $0x2c] sm:$0xf]
  %v136 = vld [vmem:[%s3 + $0x30] sm:$0xf]
  %v137 = vld [vmem:[%s3 + $0x34] sm:$0xf]
  %v138 = vld [vmem:[%s3 + $0x38] sm:$0xf]
  %v139 = vld [vmem:[%s3 + $0x3c] sm:$0xf]
  %v140 = vld [vmem:[%s3 + $0x40] sm:$0xf]
  %v141 = vld [vmem:[%s3 + $0x44] sm:$0xf]
  %v142 = vld [vmem:[%s3 + $0x48] sm:$0xf]
  %v143 = vld [vmem:[%s3 + $0x4c] sm:$0xf]
  %v144 = vld [vmem:[%s3 + $0x50] sm:$0xf]
  %v145 = vld [vmem:[%s3 + $0x54] sm:$0xf]
  %v146 = vld [vmem:[%s3 + $0x58] sm:$0xf]
  %v147 = vld [vmem:[%s3 + $0x5c] sm:$0xf]
  %v148 = vld [vmem:[%s3 + $0x60] sm:$0xf]
  %v149 = vld [vmem:[%s3 + $0x64] sm:$0xf]
  %v150 = vld [vmem:[%s3 + $0x68] sm:$0xf]
  %v151 = vld [vmem:[%s3 + $0x6c] sm:$0xf]
  %v152 = vld [vmem:[%s3 + $0x70] sm:$0xf]
  %v153 = vld [vmem:[%s3 + $0x74] sm:$0xf]
  %v154 = vld [vmem:[%s3 + $0x78] sm:$0xf]
  %v155 = vld [vmem:[%s3 + $0x7c] sm:$0xf]
  %v156 = vld [vmem:[%s3 + $0x80] sm:$0xf]
  %v157 = vld [vmem:[%s3 + $0x84] sm:$0xf]
  %v158 = vld [vmem:[%s3 + $0x88] sm:$0xf]
  %v159 = vld [vmem:[%s3 + $0x8c] sm:$0xf]
  %v160 = vld [vmem:[%s3 + $0x90] sm:$0xf]
  %v161 = vld [vmem:[%s3 + $0x94] sm:$0xf]
  %v162 = vld [vmem:[%s3 + $0x98] sm:$0xf]
  %v163 = vld [vmem:[%s3 + $0x9c] sm:$0xf]
  %v164 = vld [vmem:[%s3 + $0xa0] sm:$0xf]
  %v165 = vld [vmem:[%s3 + $0xa4] sm:$0xf]
  %v166 = vld [vmem:[%s3 + $0xa8] sm:$0xf]
  %v167 = vld [vmem:[%s3 + $0xac] sm:$0xf]
  %v168 = vld [vmem:[%s3 + $0xb0] sm:$0xf]
  %v169 = vld [vmem:[%s3 + $0xb4] sm:$0xf]
  %v170 = vld [vmem:[%s3 + $0xb8] sm:$0xf]
  %v171 = vld [vmem:[%s3 + $0xbc] sm:$0xf]
  %v172 = vld [vmem:[#allocation2] sm:$0x1]
  %v174 = vperm.slane %v172, 0
  %v224 = vunpack.c.l.b16 %v124
  %v225 = vunpack.c.l.b16 %v125
  %v226 = vunpack.c.l.b16 %v126
  %v227 = vunpack.c.l.b16 %v127
  %v228 = vunpack.c.l.b16 %v128
  %v229 = vunpack.c.l.b16 %v129
  %v230 = vunpack.c.l.b16 %v130
  %v231 = vunpack.c.l.b16 %v131
  %v232 = vunpack.c.l.b16 %v132
  %v233 = vunpack.c.l.b16 %v133
  %v234 = vunpack.c.l.b16 %v134
  %v235 = vunpack.c.l.b16 %v135
  %v236 = vunpack.c.l.b16 %v136
  %v237 = vunpack.c.l.b16 %v137
  %v238 = vunpack.c.l.b16 %v138
  %v239 = vunpack.c.l.b16 %v139
  %v240 = vunpack.c.l.b16 %v140
  %v241 = vunpack.c.l.b16 %v141
  %v242 = vunpack.c.l.b16 %v142
  %v243 = vunpack.c.l.b16 %v143
  %v244 = vunpack.c.l.b16 %v144
  %v245 = vunpack.c.l.b16 %v145
  %v246 = vunpack.c.l.b16 %v146
  %v247 = vunpack.c.l.b16 %v147
  %v248 = vunpack.c.l.b16 %v148
  %v249 = vunpack.c.l.b16 %v149
  %v250 = vunpack.c.l.b16 %v150
  %v251 = vunpack.c.l.b16 %v151
  %v252 = vunpack.c.l.b16 %v152
  %v253 = vunpack.c.l.b16 %v153
  %v254 = vunpack.c.l.b16 %v154
  %v255 = vunpack.c.l.b16 %v155
  %v256 = vunpack.c.l.b16 %v156
  %v257 = vunpack.c.l.b16 %v157
  %v258 = vunpack.c.l.b16 %v158
  %v259 = vunpack.c.l.b16 %v159
  %v260 = vunpack.c.l.b16 %v160
  %v261 = vunpack.c.l.b16 %v161
  %v262 = vunpack.c.l.b16 %v162
  %v263 = vunpack.c.l.b16 %v163
  %v264 = vunpack.c.l.b16 %v164
  %v265 = vunpack.c.l.b16 %v165
  %v266 = vunpack.c.l.b16 %v166
  %v267 = vunpack.c.l.b16 %v167
  %v268 = vunpack.c.l.b16 %v168
  %v269 = vunpack.c.l.b16 %v169
  %v270 = vunpack.c.l.b16 %v170
  %v271 = vunpack.c.l.b16 %v171
  %v272 = vpack.c.b16 %v225, %v224
  %v273 = vpack.c.b16 %v227, %v226
  %v274 = vpack.c.b16 %v229, %v228
  %v275 = vpack.c.b16 %v231, %v230
  %v276 = vpack.c.b16 %v233, %v232
  %v277 = vpack.c.b16 %v235, %v234
  %v278 = vpack.c.b16 %v237, %v236
  %v279 = vpack.c.b16 %v239, %v238
  %v280 = vpack.c.b16 %v241, %v240
  %v281 = vpack.c.b16 %v243, %v242
  %v282 = vpack.c.b16 %v245, %v244
  %v283 = vpack.c.b16 %v247, %v246
  %v284 = vpack.c.b16 %v249, %v248
  %v285 = vpack.c.b16 %v251, %v250
  %v286 = vpack.c.b16 %v253, %v252
  %v287 = vpack.c.b16 %v255, %v254
  %v288 = vpack.c.b16 %v257, %v256
  %v289 = vpack.c.b16 %v259, %v258
  %v290 = vpack.c.b16 %v261, %v260
  %v291 = vpack.c.b16 %v263, %v262
  %v292 = vpack.c.b16 %v265, %v264
  %v293 = vpack.c.b16 %v267, %v266
  %v294 = vpack.c.b16 %v269, %v268
  %v295 = vpack.c.b16 %v271, %v270
  %320 = vmatpush.bf16.msra.mxu0 %v279
  %321 = vmatpush.bf16.msra.mxu0 %v278
  %322 = vmatpush.bf16.msra.mxu0 %v277
  %323 = vmatpush.bf16.msra.mxu0 %v276
  %324 = vmatpush.bf16.msra.mxu0 %v275
  %325 = vmatpush.bf16.msra.mxu0 %v274
  %326 = vmatpush.bf16.msra.mxu0 %v273
  %327 = vmatpush.bf16.msra.mxu0 %v272
  %328 = vmatmul.bf16.gmra.mxu0 %v121
  %v329 = vpop.f32.mrf.mxu0
  %v330 = vadd.f32 %v174, %v329
  %v331 = vpop.f32.mrf.mxu0
  %332 = vdwg.mxu0
  %333 = vmatpush.bf16.msra.mxu0 %v287
  %334 = vmatpush.bf16.msra.mxu0 %v286
  %335 = vmatpush.bf16.msra.mxu0 %v285
  %336 = vmatpush.bf16.msra.mxu0 %v284
  %337 = vmatpush.bf16.msra.mxu0 %v283
  %338 = vmatpush.bf16.msra.mxu0 %v282
  %339 = vmatpush.bf16.msra.mxu0 %v281
  %340 = vmatpush.bf16.msra.mxu0 %v280
  %341 = vmatmul.bf16.gmra.mxu0 %v122
  %v342 = vpop.f32.mrf.mxu0
  %v343 = vadd.f32 %v330, %v342
  %v344 = vpop.f32.mrf.mxu0
  %345 = vdwg.mxu0
  %346 = vmatpush.bf16.msra.mxu0 %v295
  %347 = vmatpush.bf16.msra.mxu0 %v294
  %348 = vmatpush.bf16.msra.mxu0 %v293
  %349 = vmatpush.bf16.msra.mxu0 %v292
  %350 = vmatpush.bf16.msra.mxu0 %v291
  %351 = vmatpush.bf16.msra.mxu0 %v290
  %352 = vmatpush.bf16.msra.mxu0 %v289
  %353 = vmatpush.bf16.msra.mxu0 %v288
  %354 = vmatmul.bf16.gmra.mxu0 %v123
  %v355 = vpop.f32.mrf.mxu0
  %v356 = vadd.f32 %v343, %v355
  %v357 = vpop.f32.mrf.mxu0
  %358 = vdwg.mxu0
  %v359 = vsub.f32 0.0, %v356
  %v360 = vmul.f32 %v359, 1.442695
  %v361 = vpow.pop %v360
  %v362 = vadd.f32 %v361, 1.0
  %v363 = vrcp.pop %v362
  %vm364 = vcmask 7168
  %365 = vst.msk [vmem:[%s5] sm:$0xff] %vm364, %v363
  // Predicated region
  $region22: #{net_forward.1} parent=0 // pred_check
    _
  $region23: #{net_forward.1} parent=0 // pred_check_branch
    %367 = sbr.rel (0) target = $region25
  $region24: #{net_forward.1} parent=0 // pred_region
    _
  $region25: #{net_forward.1} parent=0 // pred_fallthru
    _
  // Predicated region
  $region26: #{net_forward.1} parent=0 // pred_check
    _
  $region27: #{net_forward.1} parent=0 // pred_check_branch
    %369 = sbr.rel (0) target = $region29
  $region28: #{net_forward.1} parent=0 // pred_region
    _
  $region29: #{net_forward.1} parent=0 // pred_fallthru
    _

</llo_original>
